<compile_context>
chip_gen: v5e
topology: v5e:2x2
jax: 0.10.0
libtpu: 0.0.40
codegen_flags: <defaults>
</compile_context>

<pallas_src>
import functools

import jax
import jax.numpy as jnp
from jax import lax
from jax.experimental import pallas as pl
from jax.experimental.pallas import tpu as pltpu


def _round_up(v, m):
    return ((v + m - 1) // m) * m


def _vmem_budget_bytes():
    """VMEM budget used both for tile sizing and vmem_limit_bytes.

    Uses the physical capacity when available (128 MiB v5e/v6e, 64 MiB per core
    on v7x) and leaves headroom for compiler-internal scratch.
    """
    cap = 64 * 1024 * 1024                      # conservative default (v7x)
    try:
        cap = int(pltpu.get_tpu_info().vmem_capacity_bytes)
    except Exception:
        pass
    return int(min(cap - 16 * 1024 * 1024, 96 * 1024 * 1024))


def _vmem_bytes_estimate(ts, np_nodes, f_pad, p_cols, o_cols, h_pad, fast):
    """Rough per-step VMEM footprint of the attention kernel for tile size ts."""
    xb = 2 if fast else 4          # streamed x / w_ext operand bytes
    eb = 2 if fast else 4          # element-wise temporary bytes
    est = 0
    est += 2 * ts * f_pad * xb              # x tile (double-buffered)
    est += 2 * ts * np_nodes * 1            # adj tile, int8 (double-buffered)
    est += 2 * f_pad * p_cols * xb          # w_ext (grid-invariant, 2 bufs)
    est += 2 * h_pad * np_nodes * eb        # adst_t (grid-invariant, 2 bufs)
    est += 2 * np_nodes * o_cols * 4        # resident output block (+writeback)
    est += ts * p_cols * 4                  # xw panel (f32)
    est += 3 * ts * np_nodes * eb           # logits / e / alpha live temps
    est += ts * np_nodes * 1                # edge mask
    est += ts * np_nodes * 4                # f32 cast for the denominator sum
    est += np_nodes * o_cols * 4            # contrib (f32)
    return est


def _pick_tiling(np_nodes, f_pad, p_cols, o_cols, h_pad, fast, budget,
                 requested):
    """Source-tile size (multiple of 32, divides padded node count, fits the
    VMEM budget) and the number of 'parallel' source splits (2 when possible,
    feeding both v7x TensorCores)."""
    if requested is not None:
        if np_nodes % requested or requested % 32:
            raise ValueError("block_src must be a multiple of 32 dividing the "
                             "padded node count")
        block_src = requested
    else:
        block_src = 32
        for cand in (1024, 512, 256, 128, 64, 32):
            if np_nodes % cand:
                continue
            if _vmem_bytes_estimate(cand, np_nodes, f_pad, p_cols, o_cols,
                                    h_pad, fast) <= budget:
                block_src = cand
                break
    n_blocks = np_nodes // block_src
    n_splits = 2 if n_blocks % 2 == 0 else 1
    return block_src, n_splits


# --------------------------- kernel -------------------------------------------
def _gat_attn_kernel(x_ref, w_ref, adst_ref, adj_ref, out_ref, *,
                     heads, out_channels, concat, negative_slope, fast):
    j = pl.program_id(1)

    @pl.when(j == 0)
    def _init():
        out_ref[...] = jnp.zeros_like(out_ref)

    ew = jnp.bfloat16 if fast else jnp.float32     # element-wise work dtype
    hc = heads * out_channels

    # Fused projection: every head's transformed features for this source tile
    # plus the folded <x W_h, att_src_h> columns, one MXU matmul (bf16 operands
    # in the fast path, f32 accumulate).
    xw = jnp.dot(x_ref[...], w_ref[...], preferred_element_type=jnp.float32)

    edge = adj_ref[...] != 0                                   # (Ts, NP)
    neg = jnp.asarray(-1e30, dtype=ew)                         # finite, bf16-safe

    parts = []
    for h in range(heads):                                     # small static unroll
        xh = xw[:, h * out_channels:(h + 1) * out_channels]    # (Ts, C) f32
        a_src = xw[:, hc + h:hc + h + 1].astype(ew)            # (Ts, 1)
        a_dst = adst_ref[h:h + 1, :]                           # (1, NP)
        # N^2 element-wise chain in `ew` (bf16 on the fast path); row max is
        # exact in ew, denominator accumulated in f32.
        logits = a_src + a_dst                                 # (Ts, NP)
        logits = jnp.maximum(logits, negative_slope * logits)  # leaky relu
        logits = jnp.where(edge, logits, neg)                  # mask non-edges
        m = jnp.max(logits, axis=1, keepdims=True)
        e = jnp.exp(logits - m)                                # exactly 0 off-edge
        denom = jnp.maximum(
            jnp.sum(e.astype(jnp.float32), axis=1, keepdims=True), 1e-20)
        if fast:
            alpha = e * pl.reciprocal(denom, approx=True).astype(ew)
        else:
            alpha = e / denom
        # out[d, c] += sum_s alpha[s, d] * xh[s, c]: contract the source axis
        # directly on the MXU (no explicit NxN transpose in the kernel).
        # TODO(synk): verify via pl.lower_as_mlir that contracting dim 0 of
        # alpha does not materialize an XLU transpose of the (Ts, NP) tile.
        parts.append(lax.dot_general(
            alpha, xh.astype(ew),
            dimension_numbers=(((0,), (0,)), ((), ())),
            preferred_element_type=jnp.float32))               # (NP, C) f32

    # One lane-dense accumulate into the resident output block (replaces the
    # per-head narrow masked read-modify-write sweeps).
    if concat:
        contrib = parts[0] if heads == 1 else jnp.concatenate(parts, axis=1)
    else:
        contrib = parts[0]
        for p in parts[1:]:
            contrib = contrib + p                              # mean taken in wrapper
    pad_cols = out_ref.shape[-1] - contrib.shape[-1]
    if pad_cols:
        contrib = jnp.concatenate(
            [contrib, jnp.zeros((contrib.shape[0], pad_cols), jnp.float32)],
            axis=1)
    out_ref[...] += contrib[None, :, :]


# --------------------------- wrappers -----------------------------------------
def gat_layer(x, adj, w_t, att_src, att_dst, bias, *, heads, out_channels,
              concat, negative_slope=0.2, relu_out=False, fast=True,
              block_src=None):
    n, f_in = x.shape
    hc = heads * out_channels
    out_dim = hc if concat else out_channels

    np_nodes = _round_up(n, 128)                  # padded node count (lane axis)
    f_pad = _round_up(f_in, 8)
    h_pad = _round_up(heads, 16)
    p_cols = _round_up(hc + heads, 128)           # lane-dense w_ext / xw panel
    o_cols = _round_up(max(out_dim, 1), 128)      # lane-dense output panel

    in_dtype = jnp.bfloat16 if fast else jnp.float32   # streamed matmul operands
    ew_dtype = jnp.bfloat16 if fast else jnp.float32   # element-wise dtype
    # NOTE: on v5e (no bf16 VPU/EUP) prefer fast=False.

    # ---- host-side layout / parameter prep (tiny) ----
    w_heads = [w_t[:, h * out_channels:(h + 1) * out_channels]
               for h in range(heads)]
    w_asrc = jnp.stack([wh @ att_src[h] for h, wh in enumerate(w_heads)],
                       axis=1)                                   # (F, H)
    w_adst = jnp.stack([wh @ att_dst[h] for h, wh in enumerate(w_heads)],
                       axis=1)                                   # (F, H)
    w_ext = jnp.concatenate([w_t, w_asrc], axis=1).astype(jnp.float32)
    w_ext = jnp.pad(w_ext, ((0, f_pad - f_in),
                            (0, p_cols - (hc + heads)))).astype(in_dtype)

    x_p = jnp.pad(x.astype(jnp.float32),
                  ((0, np_nodes - n), (0, f_pad - f_in)))
    adj_p = jnp.pad(adj.astype(jnp.int8),
                    ((0, np_nodes - n), (0, np_nodes - n)))

    # a_dst for every node, emitted already transposed to (h_pad, NP): a tiny
    # matmul done in plain XLA (no Pallas grid overhead, no HBM transpose).
    w_adst_p = jnp.pad(w_adst.astype(jnp.float32),
                       ((0, f_pad - f_in), (0, h_pad - heads)))
    adst_t = lax.dot_general(
        w_adst_p, x_p,
        dimension_numbers=(((0,), (1,)), ((), ()))).astype(ew_dtype)  # (h_pad, NP)

    x_p = x_p.astype(in_dtype)

    vmem_limit = _vmem_budget_bytes()
    block_src, n_splits = _pick_tiling(np_nodes, f_pad, p_cols, o_cols, h_pad,
                                       fast, vmem_limit, block_src)
    blocks_per_split = (np_nodes // block_src) // n_splits

    kernel = functools.partial(
        _gat_attn_kernel, heads=heads, out_channels=out_channels,
        concat=concat, negative_slope=negative_slope, fast=fast)

    out_p = pl.pallas_call(
        kernel,
        out_shape=jax.ShapeDtypeStruct((n_splits, np_nodes, o_cols),
                                       jnp.float32),
        grid=(n_splits, blocks_per_split),
        in_specs=[
            pl.BlockSpec((block_src, f_pad),
                         lambda c, j: (c * blocks_per_split + j, 0)),   # x tile
            pl.BlockSpec((f_pad, p_cols), lambda c, j: (0, 0)),         # w_ext
            pl.BlockSpec((h_pad, np_nodes), lambda c, j: (0, 0)),       # a_dst^T
            pl.BlockSpec((block_src, np_nodes),
                         lambda c, j: (c * blocks_per_split + j, 0)),   # adj tile
        ],
        out_specs=pl.BlockSpec((1, np_nodes, o_cols), lambda c, j: (c, 0, 0)),
        compiler_params=pltpu.CompilerParams(
            dimension_semantics=("parallel", "arbitrary"),
            vmem_limit_bytes=vmem_limit),
    )(x_p, w_ext, adst_t, adj_p)

    # Combine source splits + finalize (mean over heads, bias, ReLU) in XLA.
    out = out_p[0] if n_splits == 1 else jnp.sum(out_p, axis=0)
    out = out[:n, :out_dim]
    if not concat:
        out = out / heads
    out = out + bias.astype(jnp.float32)[None, :]
    if relu_out:
        out = jnp.maximum(out, 0.0)
    return out


def gat_forward(x, adj, params, *, heads, hidden, num_classes, fast=True,
                block_src=None):
    # conv1 (concat heads) + ReLU; dropout(p=0.5) is a no-op in eval mode.
    h = gat_layer(x, adj, params["w1_t"], params["att_src1"],
                  params["att_dst1"], params["b1"], heads=heads,
                  out_channels=hidden, concat=True, relu_out=True, fast=fast,
                  block_src=block_src)
    # conv2 (single head, concat=False -> mean over heads).
    return gat_layer(h, adj, params["w2_t"], params["att_src2"],
                     params["att_dst2"], params["b2"], heads=1,
                     out_channels=num_classes, concat=False, relu_out=False,
                     fast=fast, block_src=block_src)


# ---------------- pure-JAX reference (same dense-graph semantics) -------------
def _ref_layer(x, adj, w_t, att_src, att_dst, bias, heads, out_channels,
               concat, relu_out):
    xw = x @ w_t
    outs = []
    for h in range(heads):
        xh = xw[:, h * out_channels:(h + 1) * out_channels]
        a_s = jnp.sum(xh * att_src[h][None, :], axis=1, keepdims=True)
        a_d = jnp.sum(xh * att_dst[h][None, :], axis=1, keepdims=True)
        logits = a_s + a_d.T
        logits = jnp.where(logits >= 0, logits, 0.2 * logits)
        masked = jnp.where(adj > 0, logits, -1e30)
        e = jnp.exp(masked - jnp.max(masked, axis=1, keepdims=True)) * adj
        alpha = e / jnp.sum(e, axis=1, keepdims=True)
        outs.append(alpha.T @ xh)
    out = jnp.concatenate(outs, axis=1) if concat else sum(outs) / heads
    out = out + bias[None, :]
    return jnp.maximum(out, 0.0) if relu_out else out


def _ref_forward(x, adj, p, heads, hidden, num_classes):
    h = _ref_layer(x, adj, p["w1_t"], p["att_src1"], p["att_dst1"], p["b1"],
                   heads, hidden, True, True)
    return _ref_layer(h, adj, p["w2_t"], p["att_src2"], p["att_dst2"], p["b2"],
                      1, num_classes, False, False)


if __name__ == "__main__":
    N = 60                 # nodes (non-multiple of tile sizes -> exercises padding)
    F_IN = 16              # num_node_features
    HIDDEN = 8             # hidden_channels (per head)
    HEADS = 2
    NUM_CLASSES = 4

    key = jax.random.PRNGKey(0)
    keys = jax.random.split(key, 10)

    x = jax.random.normal(keys[0], (N, F_IN), dtype=jnp.float32)

    # Deterministic edge list (no pre-existing self loops), then dense mask
    # with self-loops added (== add_self_loops).
    idx = jnp.arange(N)
    src = jnp.concatenate([idx, idx])
    dst = jnp.concatenate([(idx + 1) % N, (idx + 7) % N])
    adj_f = jnp.zeros((N, N), jnp.float32).at[src, dst].set(1.0)
    adj_f = jnp.maximum(adj_f, jnp.eye(N, dtype=jnp.float32))
    adj_i8 = adj_f.astype(jnp.int8)

    s1 = 1.0 / jnp.sqrt(F_IN)
    s2 = 1.0 / jnp.sqrt(HIDDEN * HEADS)
    params = {
        "w1_t": jax.random.normal(keys[1], (F_IN, HEADS * HIDDEN),
                                  jnp.float32) * s1,
        "att_src1": jax.random.normal(keys[2], (HEADS, HIDDEN),
                                      jnp.float32) * 0.1,
        "att_dst1": jax.random.normal(keys[3], (HEADS, HIDDEN),
                                      jnp.float32) * 0.1,
        "b1": jax.random.normal(keys[4], (HEADS * HIDDEN,), jnp.float32) * 0.1,
        "w2_t": jax.random.normal(keys[5], (HEADS * HIDDEN, NUM_CLASSES),
                                  jnp.float32) * s2,
        "att_src2": jax.random.normal(keys[6], (1, NUM_CLASSES),
                                      jnp.float32) * 0.1,
        "att_dst2": jax.random.normal(keys[7], (1, NUM_CLASSES),
                                      jnp.float32) * 0.1,
        "b2": jax.random.normal(keys[8], (NUM_CLASSES,), jnp.float32) * 0.1,
    }

    # Strict f32 path; block_src=32 forces a multi-block source reduction and
    # the 2-way 'parallel' split (exercises accumulation + split combine).
    out_precise = jax.block_until_ready(
        gat_forward(x, adj_i8, params, heads=HEADS, hidden=HIDDEN,
                    num_classes=NUM_CLASSES, fast=False, block_src=32))
    # Recommended perf config on v6e/v7x: bf16 element-wise + bf16 MXU operands
    # + approx reciprocal, auto tile selection.  Not bit-comparable to the
    # reference (~1e-2 relative error expected).
    out_fast = jax.block_until_ready(
        gat_forward(x, adj_i8, params, heads=HEADS, hidden=HIDDEN,
                    num_classes=NUM_CLASSES, fast=True))

    ref = _ref_forward(x, adj_f, params, HEADS, HIDDEN, NUM_CLASSES)

    assert out_precise.shape == (N, NUM_CLASSES)
    assert out_fast.shape == (N, NUM_CLASSES)
    assert jnp.allclose(out_precise, ref, rtol=1e-4, atol=1e-4), \
        "precise path mismatch vs reference"
    assert jnp.allclose(out_fast, ref, rtol=5e-2, atol=5e-2), \
        "bf16 fast path mismatch vs reference"

    print("KERNEL_OK")
</pallas_src>

<mosaic_0001>
module attributes {stable_mosaic.version = 11 : i64} {
  func.func @_gat_attn_kernel(%arg0: i32, %arg1: i32, %arg2: memref<32x16xf32, #tpu.memory_space<vmem>>, %arg3: memref<16x128xf32, #tpu.memory_space<vmem>>, %arg4: memref<16x128xf32, #tpu.memory_space<vmem>>, %arg5: memref<32x128xi8, #tpu.memory_space<vmem>>, %arg6: memref<1x128x128xf32, #tpu.memory_space<vmem>>) attributes {dimension_semantics = [#tpu.dimension_semantics<parallel>, #tpu.dimension_semantics<arbitrary>], iteration_bounds = array<i64: 2, 2>, scalar_prefetch = 0 : i64, scratch_operands = 0 : i64, tpu.core_type = #tpu.core_type<tc>, window_params = [{transform_indices = @transform_0, window_bounds = array<i64: 32, 16>}, {pipeline_mode = #tpu.pipeline_mode<synchronous>, transform_indices = @transform_1, window_bounds = array<i64: 16, 128>}, {pipeline_mode = #tpu.pipeline_mode<synchronous>, transform_indices = @transform_2, window_bounds = array<i64: 16, 128>}, {transform_indices = @transform_3, window_bounds = array<i64: 32, 128>}, {transform_indices = @transform_4, window_bounds = array<i64: 1, 128, 128>}]} {
    %c0_i32 = arith.constant 0 : i32
    %0 = arith.cmpi eq, %arg1, %c0_i32 : i32
    %1 = arith.extui %0 : i1 to i32
    %c0_i32_0 = arith.constant 0 : i32
    %2 = arith.cmpi ne, %1, %c0_i32_0 : i32
    scf.if %2 {
      %cst_28 = arith.constant 0.000000e+00 : f32
      %62 = vector.broadcast %cst_28 : f32 to vector<1x128x128xf32>
      %c0_29 = arith.constant 0 : index
      %c0_30 = arith.constant 0 : index
      %c0_31 = arith.constant 0 : index
      %63 = vector.load %arg6[%c0_29, %c0_30, %c0_31] : memref<1x128x128xf32, #tpu.memory_space<vmem>>, vector<1x128x128xf32>
      tpu.vector_store %arg6[%c0_29, %c0_30, %c0_31], %62 {strides = array<i32>} : memref<1x128x128xf32, #tpu.memory_space<vmem>>, vector<1x128x128xf32>,
    } else {
    }
    %c0 = arith.constant 0 : index
    %c0_1 = arith.constant 0 : index
    %3 = vector.load %arg2[%c0, %c0_1] : memref<32x16xf32, #tpu.memory_space<vmem>>, vector<32x16xf32>
    %c0_2 = arith.constant 0 : index
    %c0_3 = arith.constant 0 : index
    %4 = vector.load %arg3[%c0_2, %c0_3] : memref<16x128xf32, #tpu.memory_space<vmem>>, vector<16x128xf32>
    %cst = arith.constant dense<0.000000e+00> : vector<32x128xf32>
    %5 = tpu.matmul %3, %4, %cst {dimension_numbers = #tpu.dot_dimension_numbers<[1], [0], [0], [1], [0, 0, 1, 1], [], []>} : vector<32x16xf32>, vector<16x128xf32>, vector<32x128xf32> -> vector<32x128xf32>
    %c0_4 = arith.constant 0 : index
    %c0_5 = arith.constant 0 : index
    %6 = vector.load %arg5[%c0_4, %c0_5] : memref<32x128xi8, #tpu.memory_space<vmem>>, vector<32x128xi8>
    %c0_i8 = arith.constant 0 : i8
    %7 = vector.broadcast %c0_i8 : i8 to vector<32x128xi8>
    %8 = arith.cmpi ne, %6, %7 : vector<32x128xi8>
    %9 = vector.extract_strided_slice %5 {offsets = [0, 0], sizes = [32, 8], strides = [1, 1]} : vector<32x128xf32> to vector<32x8xf32>
    %10 = vector.extract_strided_slice %5 {offsets = [0, 16], sizes = [32, 1], strides = [1, 1]} : vector<32x128xf32> to vector<32x1xf32>
    %c0_6 = arith.constant 0 : index
    %c0_7 = arith.constant 0 : index
    %11 = vector.load %arg4[%c0_6, %c0_7] : memref<16x128xf32, #tpu.memory_space<vmem>>, vector<1x128xf32>
    %12 = vector.broadcast %10 : vector<32x1xf32> to vector<32x128xf32>
    %13 = vector.broadcast %11 : vector<1x128xf32> to vector<32x128xf32>
    %14 = arith.addf %12, %13 : vector<32x128xf32>
    %cst_8 = arith.constant 2.000000e-01 : f32
    %15 = vector.broadcast %cst_8 : f32 to vector<32x128xf32>
    %16 = arith.mulf %15, %14 : vector<32x128xf32>
    %17 = arith.maximumf %14, %16 : vector<32x128xf32>
    %cst_9 = arith.constant -1.000000e+30 : f32
    %18 = vector.broadcast %cst_9 : f32 to vector<32x128xf32>
    %19 = arith.select %8, %17, %18 : vector<32x128xi1>, vector<32x128xf32>
    %cst_10 = arith.constant dense<0xFF800000> : vector<32xf32>
    %20 = vector.multi_reduction <maximumf>, %19, %cst_10 [1] : vector<32x128xf32> to vector<32xf32>
    %21 = vector.shape_cast %20 : vector<32xf32> to vector<32x1xf32>
    %22 = vector.broadcast %21 : vector<32x1xf32> to vector<32x128xf32>
    %23 = arith.subf %19, %22 : vector<32x128xf32>
    %24 = math.exp %23 : vector<32x128xf32>
    %cst_11 = arith.constant dense<0.000000e+00> : vector<32xf32>
    %25 = vector.multi_reduction <add>, %24, %cst_11 [1] : vector<32x128xf32> to vector<32xf32>
    %26 = vector.shape_cast %25 : vector<32xf32> to vector<32x1xf32>
    %cst_12 = arith.constant 9.99999968E-21 : f32
    %27 = vector.broadcast %cst_12 : f32 to vector<32x1xf32>
    %28 = arith.maximumf %26, %27 : vector<32x1xf32>
    %29 = vector.broadcast %28 : vector<32x1xf32> to vector<32x128xf32>
    %30 = arith.divf %24, %29 : vector<32x128xf32>
    %cst_13 = arith.constant dense<0.000000e+00> : vector<128x8xf32>
    %31 = tpu.matmul %30, %9, %cst_13 {dimension_numbers = #tpu.dot_dimension_numbers<[0], [0], [1], [1], [0, 1, 1, 1], [], []>} : vector<32x128xf32>, vector<32x8xf32>, vector<128x8xf32> -> vector<128x8xf32>
    %32 = vector.extract_strided_slice %5 {offsets = [0, 8], sizes = [32, 8], strides = [1, 1]} : vector<32x128xf32> to vector<32x8xf32>
    %33 = vector.extract_strided_slice %5 {offsets = [0, 17], sizes = [32, 1], strides = [1, 1]} : vector<32x128xf32> to vector<32x1xf32>
    %c1 = arith.constant 1 : index
    %c0_14 = arith.constant 0 : index
    %34 = vector.load %arg4[%c1, %c0_14] : memref<16x128xf32, #tpu.memory_space<vmem>>, vector<1x128xf32>
    %35 = vector.broadcast %33 : vector<32x1xf32> to vector<32x128xf32>
    %36 = vector.broadcast %34 : vector<1x128xf32> to vector<32x128xf32>
    %37 = arith.addf %35, %36 : vector<32x128xf32>
    %cst_15 = arith.constant 2.000000e-01 : f32
    %38 = vector.broadcast %cst_15 : f32 to vector<32x128xf32>
    %39 = arith.mulf %38, %37 : vector<32x128xf32>
    %40 = arith.maximumf %37, %39 : vector<32x128xf32>
    %cst_16 = arith.constant -1.000000e+30 : f32
    %41 = vector.broadcast %cst_16 : f32 to vector<32x128xf32>
    %42 = arith.select %8, %40, %41 : vector<32x128xi1>, vector<32x128xf32>
    %cst_17 = arith.constant dense<0xFF800000> : vector<32xf32>
    %43 = vector.multi_reduction <maximumf>, %42, %cst_17 [1] : vector<32x128xf32> to vector<32xf32>
    %44 = vector.shape_cast %43 : vector<32xf32> to vector<32x1xf32>
    %45 = vector.broadcast %44 : vector<32x1xf32> to vector<32x128xf32>
    %46 = arith.subf %42, %45 : vector<32x128xf32>
    %47 = math.exp %46 : vector<32x128xf32>
    %cst_18 = arith.constant dense<0.000000e+00> : vector<32xf32>
    %48 = vector.multi_reduction <add>, %47, %cst_18 [1] : vector<32x128xf32> to vector<32xf32>
    %49 = vector.shape_cast %48 : vector<32xf32> to vector<32x1xf32>
    %cst_19 = arith.constant 9.99999968E-21 : f32
    %50 = vector.broadcast %cst_19 : f32 to vector<32x1xf32>
    %51 = arith.maximumf %49, %50 : vector<32x1xf32>
    %52 = vector.broadcast %51 : vector<32x1xf32> to vector<32x128xf32>
    %53 = arith.divf %47, %52 : vector<32x128xf32>
    %cst_20 = arith.constant dense<0.000000e+00> : vector<128x8xf32>
    %54 = tpu.matmul %53, %32, %cst_20 {dimension_numbers = #tpu.dot_dimension_numbers<[0], [0], [1], [1], [0, 1, 1, 1], [], []>} : vector<32x128xf32>, vector<32x8xf32>, vector<128x8xf32> -> vector<128x8xf32>
    %55 = tpu.concatenate %31, %54 in 1 : vector<128x8xf32>, vector<128x8xf32> -> vector<128x16xf32>
    %cst_21 = arith.constant 0.000000e+00 : f32
    %56 = vector.broadcast %cst_21 : f32 to vector<128x112xf32>
    %57 = tpu.concatenate %55, %56 in 1 : vector<128x16xf32>, vector<128x112xf32> -> vector<128x128xf32>
    %c0_22 = arith.constant 0 : index
    %c0_23 = arith.constant 0 : index
    %c0_24 = arith.constant 0 : index
    %58 = vector.load %arg6[%c0_22, %c0_23, %c0_24] : memref<1x128x128xf32, #tpu.memory_space<vmem>>, vector<1x128x128xf32>
    %59 = vector.shape_cast %57 : vector<128x128xf32> to vector<1x128x128xf32>
    %60 = arith.addf %58, %59 : vector<1x128x128xf32>
    %c0_25 = arith.constant 0 : index
    %c0_26 = arith.constant 0 : index
    %c0_27 = arith.constant 0 : index
    %61 = vector.load %arg6[%c0_25, %c0_26, %c0_27] : memref<1x128x128xf32, #tpu.memory_space<vmem>>, vector<1x128x128xf32>
    tpu.vector_store %arg6[%c0_25, %c0_26, %c0_27], %60 {strides = array<i32>} : memref<1x128x128xf32, #tpu.memory_space<vmem>>, vector<1x128x128xf32>,
    return
  }
  func.func @transform_0(%arg0: i32, %arg1: i32) -> (i32, i32) {
    %c2_i32 = arith.constant 2 : i32
    %0 = arith.muli %arg0, %c2_i32 : i32
    %1 = arith.addi %0, %arg1 : i32
    %c0_i32 = arith.constant 0 : i32
    %c0_i32_0 = arith.constant 0 : i32
    return %1, %c0_i32 : i32, i32
  }
  func.func @transform_1(%arg0: i32, %arg1: i32) -> (i32, i32) {
    %c0_i32 = arith.constant 0 : i32
    %c0_i32_0 = arith.constant 0 : i32
    %c0_i32_1 = arith.constant 0 : i32
    return %c0_i32, %c0_i32_0 : i32, i32
  }
  func.func @transform_2(%arg0: i32, %arg1: i32) -> (i32, i32) {
    %c0_i32 = arith.constant 0 : i32
    %c0_i32_0 = arith.constant 0 : i32
    %c0_i32_1 = arith.constant 0 : i32
    return %c0_i32, %c0_i32_0 : i32, i32
  }
  func.func @transform_3(%arg0: i32, %arg1: i32) -> (i32, i32) {
    %c2_i32 = arith.constant 2 : i32
    %0 = arith.muli %arg0, %c2_i32 : i32
    %1 = arith.addi %0, %arg1 : i32
    %c0_i32 = arith.constant 0 : i32
    %c0_i32_0 = arith.constant 0 : i32
    return %1, %c0_i32 : i32, i32
  }
  func.func @transform_4(%arg0: i32, %arg1: i32) -> (i32, i32, i32) {
    %c0_i32 = arith.constant 0 : i32
    %c0_i32_0 = arith.constant 0 : i32
    %c0_i32_1 = arith.constant 0 : i32
    return %arg0, %c0_i32, %c0_i32_0 : i32, i32, i32
  }
}

</mosaic_0001>

<llo_original>
// kernel: tpu_custom_call.1
$region0: #{tpu_custom_call.1}
  #allocation0 [shape = 'u32[]', space=smem, size = 0x4, offset = 0x4, fixed_abs, tag = 'smem constant byte address 0x4 - core index']
  #allocation1 [shape = 'u32[72,128]{1,0:T(1,128)}', space=vmem, size = 0x9000, scoped, tag = 'internal scratch']
  %s0 = inlined_call_operand.vmem [shape: f32[128,16], index: 0, kind: input, shape index: {}]
  %s1 = inlined_call_operand.vmem [shape: f32[16,128], index: 1, kind: input, shape index: {}]
  %s2 = inlined_call_operand.vmem [shape: f32[16,128], index: 2, kind: input, shape index: {}]
  %s3 = inlined_call_operand.vmem [shape: s8[128,128], index: 3, kind: input, shape index: {}]
  %s4 = inlined_call_operand.hbm [shape: f32[2,128,128], index: 4, kind: output, shape index: {}]
  %s5 = sld [smem:[#allocation0]]
  $region53: #{tpu_custom_call.1} parent=0
    _
  %s7 = ssub.s32 1, %s5
  %s8 = scalar_select 0, %s7, %s5
  $region1: #{tpu_custom_call.1} parent=0
    #allocation2 [shape = 'u8[131072]{0}', space=vmem, size = 0x20000, scoped, tag = 'output window, operand 0']
    #allocation3 [shape = 's32[2]{0}', space=sflag, size = 0x8, scoped, tag = 'scoped memory for tpu_custom_call.1']
    %9 = vsyncpa [#allocation3], 0
    %s10 = scalar_lea.sflag [#allocation3], 1
    %11 = vsyncpa %s10, 0
    loop: start=0, step=1, limit=6
    $region2: #{tpu_custom_call.1} parent=1 // loop_pre_header
      _
    $region3: #{tpu_custom_call.1} parent=1 // loop_header
      %s13 = sphi 0, %s17
      %p14 = scmp.ge.s32.totalorder %s13, 6
      %s20 = sphi 0, %s32
      %s21 = sphi 0, %s28
      %s22 = sphi 0, %s20
      %s23 = sphi 0, %s21
      %s24 = sphi 0, %s22
      %s25 = sphi 0, %s23
      %s39 = sphi 0, %s41
      %s42 = sphi 0, %s39
      %s43 = sphi 0, %s42
      %s59 = sphi 0, %s43
      %s63 = sphi 0, %s63
      %s65 = sphi 0, %s63
      %s66 = sphi 0, %s65
      %s80 = sphi 0, %s66
      %s84 = sphi 0, %s84
      %s86 = sphi 0, %s84
      %s87 = sphi 0, %s86
      %s101 = sphi 0, %s87
      %s111 = sphi 0, %s113
      %s114 = sphi 0, %s111
      %s115 = sphi 0, %s114
      %s131 = sphi 0, %s115
      %s137 = sphi 0, %s139
      %s140 = sphi 0, %s137
      %s141 = sphi 0, %s140
      %s157 = sphi 0, %s141
    $region4: #{tpu_custom_call.1} parent=1 // loop_header_branch
      %16 = sbr.rel (%p14) target = $region8
    $region5: #{tpu_custom_call.1} parent=1 // loop_body
      %s18 = ssub.s32 %s13, 1
      %s19 = ssub.s32 %s13, 2
      %s26 = sadd.s32 1, %s21
      %p27 = scmp.ge.s32.totalorder %s26, 2
      %s28 = scalar_select %p27, 0, %s26
      %s29 = sadd.s32 1, %s20
      %s30 = scalar_select %p27, %s29, %s20
      %p31 = scmp.ge.s32.totalorder %s30, 2
      %s32 = scalar_select %p31, 0, %s30
      %s33 = smul.u32 %s20, 2
      %s34 = sadd.s32 %s33, %s21
      %s35 = smul.u32 %s32, 2
      %s36 = sadd.s32 %s35, %s28
      %s37 = ssub.s32 %s34, %s36
      %p38 = scmp.eq.s32.totalorder %s37, 0
      %s40 = sadd.s32 %s39, 1
      %s41 = scalar_select %p38, %s39, %s40
      %p44 = pneg %p38
      %p45 = scmp.eq.s32.totalorder %s13, 3
      %p46 = por %p44, %p45
      %p47 = scmp.ne.s32.totalorder %s39, %s42
      %p48 = scmp.eq.s32.totalorder %s13, 0
      %p49 = por %p47, %p48
      %p50 = scmp.ne.s32.totalorder %s39, %s42
      %p51 = scmp.eq.s32.totalorder %s18, 3
      %p52 = por %p50, %p51
      %p53 = scmp.ne.s32.totalorder %s42, %s43
      %p54 = scmp.eq.s32.totalorder %s18, 0
      %p55 = por %p53, %p54
      %p56 = scmp.ne.s32.totalorder %s42, %s43
      %p57 = scmp.eq.s32.totalorder %s19, 3
      %p58 = por %p56, %p57
      %p60 = scmp.ne.s32.totalorder %s43, %s59
      %p61 = scmp.eq.s32.totalorder %s19, 0
      %p62 = por %p60, %p61
      %s64 = sadd.s32 %s63, 1
      %p67 = scmp.eq.s32.totalorder %s13, 3
      %p68 = scmp.ne.s32.totalorder %s63, %s65
      %p69 = scmp.eq.s32.totalorder %s13, 0
      %p70 = por %p68, %p69
      %p71 = scmp.ne.s32.totalorder %s63, %s65
      %p72 = scmp.eq.s32.totalorder %s18, 3
      %p73 = por %p71, %p72
      %p74 = scmp.ne.s32.totalorder %s65, %s66
      %p75 = scmp.eq.s32.totalorder %s18, 0
      %p76 = por %p74, %p75
      %p77 = scmp.ne.s32.totalorder %s65, %s66
      %p78 = scmp.eq.s32.totalorder %s19, 3
      %p79 = por %p77, %p78
      %p81 = scmp.ne.s32.totalorder %s66, %s80
      %p82 = scmp.eq.s32.totalorder %s19, 0
      %p83 = por %p81, %p82
      %s85 = sadd.s32 %s84, 1
      %p88 = scmp.eq.s32.totalorder %s13, 3
      %p89 = scmp.ne.s32.totalorder %s84, %s86
      %p90 = scmp.eq.s32.totalorder %s13, 0
      %p91 = por %p89, %p90
      %p92 = scmp.ne.s32.totalorder %s84, %s86
      %p93 = scmp.eq.s32.totalorder %s18, 3
      %p94 = por %p92, %p93
      %p95 = scmp.ne.s32.totalorder %s86, %s87
      %p96 = scmp.eq.s32.totalorder %s18, 0
      %p97 = por %p95, %p96
      %p98 = scmp.ne.s32.totalorder %s86, %s87
      %p99 = scmp.eq.s32.totalorder %s19, 3
      %p100 = por %p98, %p99
      %p102 = scmp.ne.s32.totalorder %s87, %s101
      %p103 = scmp.eq.s32.totalorder %s19, 0
      %p104 = por %p102, %p103
      %s105 = smul.u32 %s20, 2
      %s106 = sadd.s32 %s105, %s21
      %s107 = smul.u32 %s32, 2
      %s108 = sadd.s32 %s107, %s28
      %s109 = ssub.s32 %s106, %s108
      %p110 = scmp.eq.s32.totalorder %s109, 0
      %s112 = sadd.s32 %s111, 1
      %s113 = scalar_select %p110, %s111, %s112
      %p116 = pneg %p110
      %p117 = scmp.eq.s32.totalorder %s13, 3
      %p118 = por %p116, %p117
      %p119 = scmp.ne.s32.totalorder %s111, %s114
      %p120 = scmp.eq.s32.totalorder %s13, 0
      %p121 = por %p119, %p120
      %p122 = scmp.ne.s32.totalorder %s111, %s114
      %p123 = scmp.eq.s32.totalorder %s18, 3
      %p124 = por %p122, %p123
      %p125 = scmp.ne.s32.totalorder %s114, %s115
      %p126 = scmp.eq.s32.totalorder %s18, 0
      %p127 = por %p125, %p126
      %p128 = scmp.ne.s32.totalorder %s114, %s115
      %p129 = scmp.eq.s32.totalorder %s19, 3
      %p130 = por %p128, %p129
      %p132 = scmp.ne.s32.totalorder %s115, %s131
      %p133 = scmp.eq.s32.totalorder %s19, 0
      %p134 = por %p132, %p133
      %s135 = ssub.s32 %s20, %s32
      %p136 = scmp.eq.s32.totalorder %s135, 0
      %s138 = sadd.s32 %s137, 1
      %s139 = scalar_select %p136, %s137, %s138
      %p142 = pneg %p136
      %p143 = scmp.eq.s32.totalorder %s13, 3
      %p144 = por %p142, %p143
      %p145 = scmp.ne.s32.totalorder %s137, %s140
      %p146 = scmp.eq.s32.totalorder %s13, 0
      %p147 = por %p145, %p146
      %p148 = scmp.ne.s32.totalorder %s137, %s140
      %p149 = scmp.eq.s32.totalorder %s18, 3
      %p150 = por %p148, %p149
      %p151 = scmp.ne.s32.totalorder %s140, %s141
      %p152 = scmp.eq.s32.totalorder %s18, 0
      %p153 = por %p151, %p152
      %p154 = scmp.ne.s32.totalorder %s140, %s141
      %p155 = scmp.eq.s32.totalorder %s19, 3
      %p156 = por %p154, %p155
      %p158 = scmp.ne.s32.totalorder %s141, %s157
      %p159 = scmp.eq.s32.totalorder %s19, 0
      %p160 = por %p158, %p159
      %p161 = scmp.le.s32.totalorder 1, %s13
      %p162 = scmp.lt.s32.totalorder %s13, 5
      %p163 = pnand %p161, %p162
      %p164 = pneg %p163
      // Predicated region
      $region9: #{tpu_custom_call.1} parent=5 // pred_check
        _
      $region10: #{tpu_custom_call.1} parent=5 // pred_check_branch
        %166 = sbr.rel (%p163) target = $region12
      $region11: #{tpu_custom_call.1} parent=5 // pred_region
        %s167 = ssub.s32 %s13, 1
        // Predicated region
        $region13: #{tpu_custom_call.1} parent=11 // pred_check
          %p168 = pneg %p76
        $region14: #{tpu_custom_call.1} parent=11 // pred_check_branch
          %170 = sbr.rel (%p168) target = $region16
        $region15: #{tpu_custom_call.1} parent=11 // pred_region
          _
        $region16: #{tpu_custom_call.1} parent=11 // pred_fallthru
          _
        // Predicated region
        $region17: #{tpu_custom_call.1} parent=11 // pred_check
          %p171 = pneg %p97
        $region18: #{tpu_custom_call.1} parent=11 // pred_check_branch
          %173 = sbr.rel (%p171) target = $region20
        $region19: #{tpu_custom_call.1} parent=11 // pred_region
          _
        $region20: #{tpu_custom_call.1} parent=11 // pred_fallthru
          _
      $region12: #{tpu_custom_call.1} parent=5 // pred_fallthru
        _
      %p174 = scmp.lt.s32.totalorder %s13, 4
      // Predicated region
      $region21: #{tpu_custom_call.1} parent=5 // pred_check
        %p175 = pneg %p174
      $region22: #{tpu_custom_call.1} parent=5 // pred_check_branch
        %177 = sbr.rel (%p175) target = $region24
      $region23: #{tpu_custom_call.1} parent=5 // pred_region
        // Predicated region
        $region25: #{tpu_custom_call.1} parent=23 // pred_check
          %p178 = pneg %p49
        $region26: #{tpu_custom_call.1} parent=23 // pred_check_branch
          %180 = sbr.rel (%p178) target = $region28
        $region27: #{tpu_custom_call.1} parent=23 // pred_region
          %s181 = smul.u32 %s20, 2
          %s182 = sadd.s32 %s181, %s21
          %s183 = smul.u32 4, %s182
          %p184 = scmp.lt.s32.totalorder %s183, 15
          %s185 = scalar_select %p184, %s183, 15
          %s186 = smul.addr %s185, 8
          %s187 = scalar_lea.vmem %s0, %s186
          %s188 = smul.u32 %s20, 2
          %s189 = sadd.s32 %s188, %s21
          %s190 = smul.u32 4, %s189
        $region28: #{tpu_custom_call.1} parent=23 // pred_fallthru
          _
        // Predicated region
        $region29: #{tpu_custom_call.1} parent=23 // pred_check
          %p191 = pneg %p121
        $region30: #{tpu_custom_call.1} parent=23 // pred_check_branch
          %193 = sbr.rel (%p191) target = $region32
        $region31: #{tpu_custom_call.1} parent=23 // pred_region
          %s194 = smul.u32 %s20, 2
          %s195 = sadd.s32 %s194, %s21
          %p196 = scmp.lt.s32.totalorder %s195, 3
          %s197 = scalar_select %p196, %s195, 3
          %s198 = smul.addr %s197, 8
          %s199 = scalar_lea.vmem %s3, %s198
          %s200 = smul.u32 %s20, 2
          %s201 = sadd.s32 %s200, %s21
        $region32: #{tpu_custom_call.1} parent=23 // pred_fallthru
          _
      $region24: #{tpu_custom_call.1} parent=5 // pred_fallthru
        _
      %p202 = scmp.le.s32.totalorder 1, %s13
      %p203 = scmp.lt.s32.totalorder %s13, 5
      %p204 = pnand %p202, %p203
      %p205 = pneg %p204
      // Predicated region
      $region33: #{tpu_custom_call.1} parent=5 // pred_check
        _
      $region34: #{tpu_custom_call.1} parent=5 // pred_check_branch
        %207 = sbr.rel (%p204) target = $region36
      $region35: #{tpu_custom_call.1} parent=5 // pred_region
        %s208 = ssub.s32 %s13, 1
        %s209 = smul.u32 %s22, 2
        %s210 = sadd.s32 %s209, %s23
        %s211 = smul.u32 4, %s210
        %p212 = scmp.lt.s32.totalorder %s211, 15
        %s213 = scalar_select %p212, %s211, 15
        %s214 = smul.addr %s213, 8
        %s215 = scalar_lea.vmem %s0, %s214
        %p216 = pneg %p55
        %p217 = pneg %p52
        %p218 = pneg %p76
        %p219 = pneg %p73
        %p220 = pneg %p97
        %p221 = pneg %p94
        %s222 = smul.u32 %s22, 2
        %s223 = sadd.s32 %s222, %s23
        %p224 = scmp.lt.s32.totalorder %s223, 3
        %s225 = scalar_select %p224, %s223, 3
        %s226 = smul.addr %s225, 8
        %s227 = scalar_lea.vmem %s3, %s226
        %p228 = pneg %p127
        %p229 = pneg %p124
        %p230 = pneg %p153
        %p231 = pneg %p150
        %s232 = sand.u32 %s140, 1
        %s233 = scalar_lea.sflag [#allocation3], %s232
        %s234 = sand.u32 %s140, 1
        %s235 = smul.addr %s234, 128
        %s236 = scalar_lea.vmem [#allocation2], %s235
        %s237 = smul.u32 %s22, 2
        %s238 = sadd.s32 %s237, %s23
        %s239 = smul.u32 4, %s238
        %p240 = scmp.lt.s32.totalorder %s239, 15
        %s241 = scalar_select %p240, %s239, 15
        %s242 = smul.addr %s241, 8
        %s243 = scalar_lea.vmem %s0, %s242
        %s244 = smul.u32 %s22, 2
        %s245 = sadd.s32 %s244, %s23
        %s246 = smul.u32 4, %s245
        %s247 = smul.u32 %s22, 2
        %s248 = sadd.s32 %s247, %s23
        %p249 = scmp.lt.s32.totalorder %s248, 3
        %s250 = scalar_select %p249, %s248, 3
        %s251 = smul.addr %s250, 8
        %s252 = scalar_lea.vmem %s3, %s251
        %s253 = smul.u32 %s22, 2
        %s254 = sadd.s32 %s253, %s23
        %p257 = scmp.eq.s32.totalorder %s23, 0
        // Predicated region
        $region37: #{tpu_custom_call.1} parent=35 // pred_check
          %p258 = pneg %p257
        $region38: #{tpu_custom_call.1} parent=35 // pred_check_branch
          %260 = sbr.rel (%p258) target = $region40
        $region39: #{tpu_custom_call.1} parent=35 // pred_region
          %261 = vst [vmem:[%s236] sm:$0xff] 0.0
          %262 = vst [vmem:[%s236 + $0x8] sm:$0xff] 0.0
          %263 = vst [vmem:[%s236 + $0x10] sm:$0xff] 0.0
          %264 = vst [vmem:[%s236 + $0x18] sm:$0xff] 0.0
          %265 = vst [vmem:[%s236 + $0x20] sm:$0xff] 0.0
          %266 = vst [vmem:[%s236 + $0x28] sm:$0xff] 0.0
          %267 = vst [vmem:[%s236 + $0x30] sm:$0xff] 0.0
          %268 = vst [vmem:[%s236 + $0x38] sm:$0xff] 0.0
          %269 = vst [vmem:[%s236 + $0x40] sm:$0xff] 0.0
          %270 = vst [vmem:[%s236 + $0x48] sm:$0xff] 0.0
          %271 = vst [vmem:[%s236 + $0x50] sm:$0xff] 0.0
          %272 = vst [vmem:[%s236 + $0x58] sm:$0xff] 0.0
          %273 = vst [vmem:[%s236 + $0x60] sm:$0xff] 0.0
          %274 = vst [vmem:[%s236 + $0x68] sm:$0xff] 0.0
          %275 = vst [vmem:[%s236 + $0x70] sm:$0xff] 0.0
          %276 = vst [vmem:[%s236 + $0x78] sm:$0xff] 0.0
        $region40: #{tpu_custom_call.1} parent=35 // pred_fallthru
          _
        %v277 = vld [vmem:[%s243] sm:$0xff]
        %v278 = vld [vmem:[%s243 + $0x8] sm:$0xff]
        %v279 = vld [vmem:[%s243 + $0x10] sm:$0xff]
        %v280 = vld [vmem:[%s243 + $0x18] sm:$0xff]
        %v281 = vld [vmem:[%s1] sm:$0xff]
        %v282 = vld [vmem:[%s1 + $0x8] sm:$0xff]
        %vm283 = vcmask 130048
        %v285 = vsel %vm283, %v277, 0
        %v288 = vsel %vm283, %v278, 0
        %v291 = vsel %vm283, %v279, 0
        %v294 = vsel %vm283, %v280, 0
        %296 = vmatpush.msra.mxu0 0.0
        %297 = vmatpush.msra.mxu0 0.0
        %298 = vmatpush.msra.mxu0 0.0
        %299 = vmatpush.msra.mxu0 0.0
        %300 = vmatpush.msra.mxu0 0.0
        %301 = vmatpush.msra.mxu0 0.0
        %302 = vmatpush.msra.mxu0 0.0
        %303 = vmatpush.msra.mxu0 0.0
        %304 = vmatpush.msra.mxu0 0.0
        %305 = vmatpush.msra.mxu0 0.0
        %306 = vmatpush.msra.mxu0 0.0
        %307 = vmatpush.msra.mxu0 0.0
        %308 = vmatpush.msra.mxu0 0.0
        %309 = vmatpush.msra.mxu0 0.0
        %310 = vmatpush.msra.mxu0 %v282
        %311 = vmatpush.msra.mxu0 %v281
        %312 = vmatmul.f32.gmra.mxu0 %v285
        %v313 = vpop.f32.mrf.mxu0
        %v314 = vadd.f32 0.0, %v313
        %315 = vmatmul.f32.gmra.mxu0 %v288
        %v316 = vpop.f32.mrf.mxu0
        %v317 = vadd.f32 0.0, %v316
        %318 = vmatmul.f32.gmra.mxu0 %v291
        %v319 = vpop.f32.mrf.mxu0
        %v320 = vadd.f32 0.0, %v319
        %321 = vmatmul.f32.gmra.mxu0 %v294
        %v322 = vpop.f32.mrf.mxu0
        %v323 = vadd.f32 0.0, %v322
        %324 = vdwg.mxu0
        %v325 = vld [vmem:[%s252] sm:$0xff]
        %vm326 = vnez %v325
        %v327 = vld [vmem:[%s2] sm:$0x1]
        %329 = vset.pattern.permute.xlu0 16
        %330 = vperm.xlu0 %329, %v314
        %v331 = vpop.permute.xlu0 %330
        %334 = vset.pattern.permute.xlu0 16
        %335 = vperm.xlu0 %334, %v317
        %v336 = vpop.permute.xlu0 %335
        %339 = vset.pattern.permute.xlu0 16
        %340 = vperm.xlu0 %339, %v320
        %v341 = vpop.permute.xlu0 %340
        %344 = vset.pattern.permute.xlu0 16
        %345 = vperm.xlu0 %344, %v323
        %v346 = vpop.permute.xlu0 %345
        %v348 = vperm.slane %v327, 0
        %v349 = vadd.f32 %v331, %v348
        %v350 = vadd.f32 %v336, %v348
        %v351 = vadd.f32 %v341, %v348
        %v352 = vadd.f32 %v346, %v348
        %v353 = vmul.f32 %v349, 0.2
        %v354 = vmul.f32 %v350, 0.2
        %v355 = vmul.f32 %v351, 0.2
        %v356 = vmul.f32 %v352, 0.2
        %v357 = vmax.f32 %v349, %v353
        %v358 = vmax.f32 %v350, %v354
        %v359 = vmax.f32 %v351, %v355
        %v360 = vmax.f32 %v352, %v356
        %v361 = vsel %vm326, 16843009, 0
        %v362 = vunpack.c.0.s8 %v361
        %v363 = vunpack.c.1.s8 %v361
        %v364 = vunpack.c.2.s8 %v361
        %v365 = vunpack.c.3.s8 %v361
        %v366 = vpack.c.b16 %v362, %v362
        %v367 = vpack.c.b8 %v366, %v366
        %v368 = vpack.c.b16 %v363, %v363
        %v369 = vpack.c.b8 %v368, %v368
        %v370 = vpack.c.b16 %v364, %v364
        %v371 = vpack.c.b8 %v370, %v370
        %v372 = vpack.c.b16 %v365, %v365
        %v373 = vpack.c.b8 %v372, %v372
        %vm374 = vnez %v367
        %vm375 = vnez %v369
        %vm376 = vnez %v371
        %vm377 = vnez %v373
        %v378 = vsel %vm374, 16843009, 0
        %v379 = vsel %vm375, 16843009, 0
        %v380 = vsel %vm376, 16843009, 0
        %v381 = vsel %vm377, 16843009, 0
        %v382 = vunpack.c.0.s8 %v378
        %v383 = vunpack.c.0.s8 %v379
        %v384 = vunpack.c.0.s8 %v380
        %v385 = vunpack.c.0.s8 %v381
        %vm386 = vcmp.ne.s32.totalorder %v382, 0
        %vm387 = vcmp.ne.s32.totalorder %v383, 0
        %vm388 = vcmp.ne.s32.totalorder %v384, 0
        %vm389 = vcmp.ne.s32.totalorder %v385, 0
        %v390 = vsel %vm386, %v357, -1e+30
        %v391 = vsel %vm387, %v358, -1e+30
        %v392 = vsel %vm388, %v359, -1e+30
        %v393 = vsel %vm389, %v360, -1e+30
        %394 = vmax.xlane.f32.xlu0 %v390
        %v395 = vpop.xlane.xlu0 %394
        %396 = vmax.xlane.f32.xlu0 %v391
        %v397 = vpop.xlane.xlu0 %396
        %398 = vmax.xlane.f32.xlu0 %v392
        %v399 = vpop.xlane.xlu0 %398
        %400 = vmax.xlane.f32.xlu0 %v393
        %v401 = vpop.xlane.xlu0 %400
        %v402 = vsub.f32 %v390, %v395
        %v403 = vsub.f32 %v391, %v397
        %v404 = vsub.f32 %v392, %v399
        %v405 = vsub.f32 %v393, %v401
        %v406 = vmul.f32 %v402, 1.442695
        %v407 = vpow.pop %v406
        %v408 = vmul.f32 %v403, 1.442695
        %v409 = vpow.pop %v408
        %v410 = vmul.f32 %v404, 1.442695
        %v411 = vpow.pop %v410
        %v412 = vmul.f32 %v405, 1.442695
        %v413 = vpow.pop %v412
        %414 = vadd.xlane.f32.xlu0 %v407
        %v415 = vpop.xlane.xlu0 %414
        %416 = vadd.xlane.f32.xlu0 %v409
        %v417 = vpop.xlane.xlu0 %416
        %418 = vadd.xlane.f32.xlu0 %v411
        %v419 = vpop.xlane.xlu0 %418
        %420 = vadd.xlane.f32.xlu0 %v413
        %v421 = vpop.xlane.xlu0 %420
        %v422 = vmax.f32 %v415, 1e-20
        %v423 = vmax.f32 %v417, 1e-20
        %v424 = vmax.f32 %v419, 1e-20
        %v425 = vmax.f32 %v421, 1e-20
        %v426 = vrcp.pop %v422
        %v427 = vmul.f32 %v422, %v426
        %v428 = vsub.f32 1.0, %v427
        %v429 = vmul.f32 %v426, %v428
        %v430 = vadd.f32 %v426, %v429
        %vm431 = vweird.f32 %v422
        %vm432 = vweird.f32 %v426
        %vm433 = vmor %vm431, %vm432
        %v434 = vsel %vm433, %v426, %v430
        %v435 = vand.u32 2147483647, %v422
        %vm436 = vcmp.eq.f32.partialorder %v435, 8.507059e+37
        %v437 = vand.u32 %v422, 2147483648
        %v438 = vor.u32 1.1754944e-38, %v437
        %v439 = vsel %vm436, %v438, %v434
        %v440 = vmul.f32 %v407, %v439
        %v441 = vrcp.pop %v423
        %v442 = vmul.f32 %v423, %v441
        %v443 = vsub.f32 1.0, %v442
        %v444 = vmul.f32 %v441, %v443
        %v445 = vadd.f32 %v441, %v444
        %vm446 = vweird.f32 %v423
        %vm447 = vweird.f32 %v441
        %vm448 = vmor %vm446, %vm447
        %v449 = vsel %vm448, %v441, %v445
        %v450 = vand.u32 2147483647, %v423
        %vm451 = vcmp.eq.f32.partialorder %v450, 8.507059e+37
        %v452 = vand.u32 %v423, 2147483648
        %v453 = vor.u32 1.1754944e-38, %v452
        %v454 = vsel %vm451, %v453, %v449
        %v455 = vmul.f32 %v409, %v454
        %v456 = vrcp.pop %v424
        %v457 = vmul.f32 %v424, %v456
        %v458 = vsub.f32 1.0, %v457
        %v459 = vmul.f32 %v456, %v458
        %v460 = vadd.f32 %v456, %v459
        %vm461 = vweird.f32 %v424
        %vm462 = vweird.f32 %v456
        %vm463 = vmor %vm461, %vm462
        %v464 = vsel %vm463, %v456, %v460
        %v465 = vand.u32 2147483647, %v424
        %vm466 = vcmp.eq.f32.partialorder %v465, 8.507059e+37
        %v467 = vand.u32 %v424, 2147483648
        %v468 = vor.u32 1.1754944e-38, %v467
        %v469 = vsel %vm466, %v468, %v464
        %v470 = vmul.f32 %v411, %v469
        %v471 = vrcp.pop %v425
        %v472 = vmul.f32 %v425, %v471
        %v473 = vsub.f32 1.0, %v472
        %v474 = vmul.f32 %v471, %v473
        %v475 = vadd.f32 %v471, %v474
        %vm476 = vweird.f32 %v425
        %vm477 = vweird.f32 %v471
        %vm478 = vmor %vm476, %vm477
        %v479 = vsel %vm478, %v471, %v475
        %v480 = vand.u32 2147483647, %v425
        %vm481 = vcmp.eq.f32.partialorder %v480, 8.507059e+37
        %v482 = vand.u32 %v425, 2147483648
        %v483 = vor.u32 1.1754944e-38, %v482
        %v484 = vsel %vm481, %v483, %v479
        %v485 = vmul.f32 %v413, %v484
        %486 = vxpose.xlu0.b32.start [1/16] %v440, 128
        %487 = vxpose.xlu0.b32.cont [2/16] %v455, 128
        %488 = vxpose.xlu0.b32.cont [3/16] %v470, 128
        %489 = vxpose.xlu0.b32.cont [4/16] %v485, 128
        %490 = vxpose.xlu0.b32.cont [5/16] 0.0, 128
        %491 = vxpose.xlu0.b32.cont [6/16] 0.0, 128
        %492 = vxpose.xlu0.b32.cont [7/16] 0.0, 128
        %493 = vxpose.xlu0.b32.cont [8/16] 0.0, 128
        %494 = vxpose.xlu0.b32.cont [9/16] 0.0, 128
        %495 = vxpose.xlu0.b32.cont [10/16] 0.0, 128
        %496 = vxpose.xlu0.b32.cont [11/16] 0.0, 128
        %497 = vxpose.xlu0.b32.cont [12/16] 0.0, 128
        %498 = vxpose.xlu0.b32.cont [13/16] 0.0, 128
        %499 = vxpose.xlu0.b32.cont [14/16] 0.0, 128
        %500 = vxpose.xlu0.b32.cont [15/16] 0.0, 128
        %501 = vxpose.xlu0.b32.end [16/16] 0.0, 128
        %v502 = vpop.trf.xlu0
        %v503 = vpop.trf.xlu0
        %v504 = vpop.trf.xlu0
        %v505 = vpop.trf.xlu0
        %v506 = vpop.trf.xlu0
        %v507 = vpop.trf.xlu0
        %v508 = vpop.trf.xlu0
        %v509 = vpop.trf.xlu0
        %v510 = vpop.trf.xlu0
        %v511 = vpop.trf.xlu0
        %v512 = vpop.trf.xlu0
        %v513 = vpop.trf.xlu0
        %v514 = vpop.trf.xlu0
        %v515 = vpop.trf.xlu0
        %v516 = vpop.trf.xlu0
        %v517 = vpop.trf.xlu0
        %vm518 = vcmask 261120
        %v520 = vsel %vm518, %v502, 0
        %v523 = vsel %vm518, %v503, 0
        %v526 = vsel %vm518, %v504, 0
        %v529 = vsel %vm518, %v505, 0
        %v532 = vsel %vm518, %v506, 0
        %v535 = vsel %vm518, %v507, 0
        %v538 = vsel %vm518, %v508, 0
        %v541 = vsel %vm518, %v509, 0
        %v544 = vsel %vm518, %v510, 0
        %v547 = vsel %vm518, %v511, 0
        %v550 = vsel %vm518, %v512, 0
        %v553 = vsel %vm518, %v513, 0
        %v556 = vsel %vm518, %v514, 0
        %v559 = vsel %vm518, %v515, 0
        %v562 = vsel %vm518, %v516, 0
        %v565 = vsel %vm518, %v517, 0
        %567 = vmatpush.msra.mxu0 0.0
        %568 = vmatpush.msra.mxu0 0.0
        %569 = vmatpush.msra.mxu0 0.0
        %570 = vmatpush.msra.mxu0 0.0
        %571 = vmatpush.msra.mxu0 0.0
        %572 = vmatpush.msra.mxu0 0.0
        %573 = vmatpush.msra.mxu0 0.0
        %574 = vmatpush.msra.mxu0 0.0
        %575 = vmatpush.msra.mxu0 0.0
        %576 = vmatpush.msra.mxu0 0.0
        %577 = vmatpush.msra.mxu0 0.0
        %578 = vmatpush.msra.mxu0 0.0
        %579 = vmatpush.msra.mxu0 %v323
        %580 = vmatpush.msra.mxu0 %v320
        %581 = vmatpush.msra.mxu0 %v317
        %582 = vmatpush.msra.mxu0 %v314
        %583 = vmatmul.f32.gmra.mxu0 %v520
        %v584 = vpop.f32.mrf.mxu0
        %v585 = vadd.f32 0.0, %v584
        %586 = vmatmul.f32.gmra.mxu0 %v523
        %v587 = vpop.f32.mrf.mxu0
        %v588 = vadd.f32 0.0, %v587
        %589 = vmatmul.f32.gmra.mxu0 %v526
        %v590 = vpop.f32.mrf.mxu0
        %v591 = vadd.f32 0.0, %v590
        %592 = vmatmul.f32.gmra.mxu0 %v529
        %v593 = vpop.f32.mrf.mxu0
        %v594 = vadd.f32 0.0, %v593
        %595 = vmatmul.f32.gmra.mxu0 %v532
        %v596 = vpop.f32.mrf.mxu0
        %v597 = vadd.f32 0.0, %v596
        %598 = vmatmul.f32.gmra.mxu0 %v535
        %v599 = vpop.f32.mrf.mxu0
        %v600 = vadd.f32 0.0, %v599
        %601 = vmatmul.f32.gmra.mxu0 %v538
        %v602 = vpop.f32.mrf.mxu0
        %v603 = vadd.f32 0.0, %v602
        %604 = vmatmul.f32.gmra.mxu0 %v541
        %v605 = vpop.f32.mrf.mxu0
        %v606 = vadd.f32 0.0, %v605
        %607 = vmatmul.f32.gmra.mxu0 %v544
        %v608 = vpop.f32.mrf.mxu0
        %v609 = vadd.f32 0.0, %v608
        %610 = vmatmul.f32.gmra.mxu0 %v547
        %v611 = vpop.f32.mrf.mxu0
        %v612 = vadd.f32 0.0, %v611
        %613 = vmatmul.f32.gmra.mxu0 %v550
        %v614 = vpop.f32.mrf.mxu0
        %v615 = vadd.f32 0.0, %v614
        %616 = vmatmul.f32.gmra.mxu0 %v553
        %v617 = vpop.f32.mrf.mxu0
        %v618 = vadd.f32 0.0, %v617
        %619 = vmatmul.f32.gmra.mxu0 %v556
        %v620 = vpop.f32.mrf.mxu0
        %v621 = vadd.f32 0.0, %v620
        %622 = vmatmul.f32.gmra.mxu0 %v559
        %v623 = vpop.f32.mrf.mxu0
        %v624 = vadd.f32 0.0, %v623
        %625 = vmatmul.f32.gmra.mxu0 %v562
        %v626 = vpop.f32.mrf.mxu0
        %v627 = vadd.f32 0.0, %v626
        %628 = vmatmul.f32.gmra.mxu0 %v565
        %v629 = vpop.f32.mrf.mxu0
        %v630 = vadd.f32 0.0, %v629
        %631 = vdwg.mxu0
        %v632 = vld [vmem:[%s2 + $0x1] sm:$0x1]
        %633 = vset.pattern.permute.xlu0 17
        %634 = vperm.xlu0 %633, %v314
        %v635 = vpop.permute.xlu0 %634
        %637 = vset.pattern.permute.xlu0 17
        %638 = vperm.xlu0 %637, %v317
        %v639 = vpop.permute.xlu0 %638
        %641 = vset.pattern.permute.xlu0 17
        %642 = vperm.xlu0 %641, %v320
        %v643 = vpop.permute.xlu0 %642
        %645 = vset.pattern.permute.xlu0 17
        %646 = vperm.xlu0 %645, %v323
        %v647 = vpop.permute.xlu0 %646
        %v649 = vperm.slane %v632, 0
        %v650 = vadd.f32 %v635, %v649
        %v651 = vadd.f32 %v639, %v649
        %v652 = vadd.f32 %v643, %v649
        %v653 = vadd.f32 %v647, %v649
        %v654 = vmul.f32 %v650, 0.2
        %v655 = vmul.f32 %v651, 0.2
        %v656 = vmul.f32 %v652, 0.2
        %v657 = vmul.f32 %v653, 0.2
        %v658 = vmax.f32 %v650, %v654
        %v659 = vmax.f32 %v651, %v655
        %v660 = vmax.f32 %v652, %v656
        %v661 = vmax.f32 %v653, %v657
        %v662 = vsel %vm386, %v658, -1e+30
        %v663 = vsel %vm387, %v659, -1e+30
        %v664 = vsel %vm388, %v660, -1e+30
        %v665 = vsel %vm389, %v661, -1e+30
        %666 = vmax.xlane.f32.xlu0 %v662
        %v667 = vpop.xlane.xlu0 %666
        %668 = vmax.xlane.f32.xlu0 %v663
        %v669 = vpop.xlane.xlu0 %668
        %670 = vmax.xlane.f32.xlu0 %v664
        %v671 = vpop.xlane.xlu0 %670
        %672 = vmax.xlane.f32.xlu0 %v665
        %v673 = vpop.xlane.xlu0 %672
        %v674 = vsub.f32 %v662, %v667
        %v675 = vsub.f32 %v663, %v669
        %v676 = vsub.f32 %v664, %v671
        %v677 = vsub.f32 %v665, %v673
        %v678 = vmul.f32 %v674, 1.442695
        %v679 = vpow.pop %v678
        %v680 = vmul.f32 %v675, 1.442695
        %v681 = vpow.pop %v680
        %v682 = vmul.f32 %v676, 1.442695
        %v683 = vpow.pop %v682
        %v684 = vmul.f32 %v677, 1.442695
        %v685 = vpow.pop %v684
        %686 = vadd.xlane.f32.xlu0 %v679
        %v687 = vpop.xlane.xlu0 %686
        %688 = vadd.xlane.f32.xlu0 %v681
        %v689 = vpop.xlane.xlu0 %688
        %690 = vadd.xlane.f32.xlu0 %v683
        %v691 = vpop.xlane.xlu0 %690
        %692 = vadd.xlane.f32.xlu0 %v685
        %v693 = vpop.xlane.xlu0 %692
        %v694 = vmax.f32 %v687, 1e-20
        %v695 = vmax.f32 %v689, 1e-20
        %v696 = vmax.f32 %v691, 1e-20
        %v697 = vmax.f32 %v693, 1e-20
        %v698 = vrcp.pop %v694
        %v699 = vmul.f32 %v694, %v698
        %v700 = vsub.f32 1.0, %v699
        %v701 = vmul.f32 %v698, %v700
        %v702 = vadd.f32 %v698, %v701
        %vm703 = vweird.f32 %v694
        %vm704 = vweird.f32 %v698
        %vm705 = vmor %vm703, %vm704
        %v706 = vsel %vm705, %v698, %v702
        %v707 = vand.u32 2147483647, %v694
        %vm708 = vcmp.eq.f32.partialorder %v707, 8.507059e+37
        %v709 = vand.u32 %v694, 2147483648
        %v710 = vor.u32 1.1754944e-38, %v709
        %v711 = vsel %vm708, %v710, %v706
        %v712 = vmul.f32 %v679, %v711
        %v713 = vrcp.pop %v695
        %v714 = vmul.f32 %v695, %v713
        %v715 = vsub.f32 1.0, %v714
        %v716 = vmul.f32 %v713, %v715
        %v717 = vadd.f32 %v713, %v716
        %vm718 = vweird.f32 %v695
        %vm719 = vweird.f32 %v713
        %vm720 = vmor %vm718, %vm719
        %v721 = vsel %vm720, %v713, %v717
        %v722 = vand.u32 2147483647, %v695
        %vm723 = vcmp.eq.f32.partialorder %v722, 8.507059e+37
        %v724 = vand.u32 %v695, 2147483648
        %v725 = vor.u32 1.1754944e-38, %v724
        %v726 = vsel %vm723, %v725, %v721
        %v727 = vmul.f32 %v681, %v726
        %v728 = vrcp.pop %v696
        %v729 = vmul.f32 %v696, %v728
        %v730 = vsub.f32 1.0, %v729
        %v731 = vmul.f32 %v728, %v730
        %v732 = vadd.f32 %v728, %v731
        %vm733 = vweird.f32 %v696
        %vm734 = vweird.f32 %v728
        %vm735 = vmor %vm733, %vm734
        %v736 = vsel %vm735, %v728, %v732
        %v737 = vand.u32 2147483647, %v696
        %vm738 = vcmp.eq.f32.partialorder %v737, 8.507059e+37
        %v739 = vand.u32 %v696, 2147483648
        %v740 = vor.u32 1.1754944e-38, %v739
        %v741 = vsel %vm738, %v740, %v736
        %v742 = vmul.f32 %v683, %v741
        %v743 = vrcp.pop %v697
        %v744 = vmul.f32 %v697, %v743
        %v745 = vsub.f32 1.0, %v744
        %v746 = vmul.f32 %v743, %v745
        %v747 = vadd.f32 %v743, %v746
        %vm748 = vweird.f32 %v697
        %vm749 = vweird.f32 %v743
        %vm750 = vmor %vm748, %vm749
        %v751 = vsel %vm750, %v743, %v747
        %v752 = vand.u32 2147483647, %v697
        %vm753 = vcmp.eq.f32.partialorder %v752, 8.507059e+37
        %v754 = vand.u32 %v697, 2147483648
        %v755 = vor.u32 1.1754944e-38, %v754
        %v756 = vsel %vm753, %v755, %v751
        %v757 = vmul.f32 %v685, %v756
        %758 = vxpose.xlu0.b32.start [1/16] %v712, 128
        %759 = vxpose.xlu0.b32.cont [2/16] %v727, 128
        %760 = vxpose.xlu0.b32.cont [3/16] %v742, 128
        %761 = vxpose.xlu0.b32.cont [4/16] %v757, 128
        %762 = vxpose.xlu0.b32.cont [5/16] 0.0, 128
        %763 = vxpose.xlu0.b32.cont [6/16] 0.0, 128
        %764 = vxpose.xlu0.b32.cont [7/16] 0.0, 128
        %765 = vxpose.xlu0.b32.cont [8/16] 0.0, 128
        %766 = vxpose.xlu0.b32.cont [9/16] 0.0, 128
        %767 = vxpose.xlu0.b32.cont [10/16] 0.0, 128
        %768 = vxpose.xlu0.b32.cont [11/16] 0.0, 128
        %769 = vxpose.xlu0.b32.cont [12/16] 0.0, 128
        %770 = vxpose.xlu0.b32.cont [13/16] 0.0, 128
        %771 = vxpose.xlu0.b32.cont [14/16] 0.0, 128
        %772 = vxpose.xlu0.b32.cont [15/16] 0.0, 128
        %773 = vxpose.xlu0.b32.end [16/16] 0.0, 128
        %v774 = vpop.trf.xlu0
        %v775 = vpop.trf.xlu0
        %v776 = vpop.trf.xlu0
        %v777 = vpop.trf.xlu0
        %v778 = vpop.trf.xlu0
        %v779 = vpop.trf.xlu0
        %v780 = vpop.trf.xlu0
        %v781 = vpop.trf.xlu0
        %v782 = vpop.trf.xlu0
        %v783 = vpop.trf.xlu0
        %v784 = vpop.trf.xlu0
        %v785 = vpop.trf.xlu0
        %v786 = vpop.trf.xlu0
        %v787 = vpop.trf.xlu0
        %v788 = vpop.trf.xlu0
        %v789 = vpop.trf.xlu0
        %790 = vrot.lane.b32.xlu0 %v314, 120
        %v791 = vpop.permute.xlu0 %790
        %792 = vrot.lane.b32.xlu0 %v317, 120
        %v793 = vpop.permute.xlu0 %792
        %794 = vrot.lane.b32.xlu0 %v320, 120
        %v795 = vpop.permute.xlu0 %794
        %796 = vrot.lane.b32.xlu0 %v323, 120
        %v797 = vpop.permute.xlu0 %796
        %v803 = vsel %vm518, %v774, 0
        %v806 = vsel %vm518, %v775, 0
        %v809 = vsel %vm518, %v776, 0
        %v812 = vsel %vm518, %v777, 0
        %v815 = vsel %vm518, %v778, 0
        %v818 = vsel %vm518, %v779, 0
        %v821 = vsel %vm518, %v780, 0
        %v824 = vsel %vm518, %v781, 0
        %v827 = vsel %vm518, %v782, 0
        %v830 = vsel %vm518, %v783, 0
        %v833 = vsel %vm518, %v784, 0
        %v836 = vsel %vm518, %v785, 0
        %v839 = vsel %vm518, %v786, 0
        %v842 = vsel %vm518, %v787, 0
        %v845 = vsel %vm518, %v788, 0
        %v848 = vsel %vm518, %v789, 0
        %850 = vmatpush.msra.mxu0 0.0
        %851 = vmatpush.msra.mxu0 0.0
        %852 = vmatpush.msra.mxu0 0.0
        %853 = vmatpush.msra.mxu0 0.0
        %854 = vmatpush.msra.mxu0 0.0
        %855 = vmatpush.msra.mxu0 0.0
        %856 = vmatpush.msra.mxu0 0.0
        %857 = vmatpush.msra.mxu0 0.0
        %858 = vmatpush.msra.mxu0 0.0
        %859 = vmatpush.msra.mxu0 0.0
        %860 = vmatpush.msra.mxu0 0.0
        %861 = vmatpush.msra.mxu0 0.0
        %862 = vmatpush.msra.mxu0 %v797
        %863 = vmatpush.msra.mxu0 %v795
        %864 = vmatpush.msra.mxu0 %v793
        %865 = vmatpush.msra.mxu0 %v791
        %866 = vmatmul.f32.gmra.mxu0 %v803
        %v867 = vpop.f32.mrf.mxu0
        %v868 = vadd.f32 0.0, %v867
        %869 = vmatmul.f32.gmra.mxu0 %v806
        %v870 = vpop.f32.mrf.mxu0
        %v871 = vadd.f32 0.0, %v870
        %872 = vmatmul.f32.gmra.mxu0 %v809
        %v873 = vpop.f32.mrf.mxu0
        %v874 = vadd.f32 0.0, %v873
        %875 = vmatmul.f32.gmra.mxu0 %v812
        %v876 = vpop.f32.mrf.mxu0
        %v877 = vadd.f32 0.0, %v876
        %878 = vmatmul.f32.gmra.mxu0 %v815
        %v879 = vpop.f32.mrf.mxu0
        %v880 = vadd.f32 0.0, %v879
        %881 = vmatmul.f32.gmra.mxu0 %v818
        %v882 = vpop.f32.mrf.mxu0
        %v883 = vadd.f32 0.0, %v882
        %884 = vmatmul.f32.gmra.mxu0 %v821
        %v885 = vpop.f32.mrf.mxu0
        %v886 = vadd.f32 0.0, %v885
        %887 = vmatmul.f32.gmra.mxu0 %v824
        %v888 = vpop.f32.mrf.mxu0
        %v889 = vadd.f32 0.0, %v888
        %890 = vmatmul.f32.gmra.mxu0 %v827
        %v891 = vpop.f32.mrf.mxu0
        %v892 = vadd.f32 0.0, %v891
        %893 = vmatmul.f32.gmra.mxu0 %v830
        %v894 = vpop.f32.mrf.mxu0
        %v895 = vadd.f32 0.0, %v894
        %896 = vmatmul.f32.gmra.mxu0 %v833
        %v897 = vpop.f32.mrf.mxu0
        %v898 = vadd.f32 0.0, %v897
        %899 = vmatmul.f32.gmra.mxu0 %v836
        %v900 = vpop.f32.mrf.mxu0
        %v901 = vadd.f32 0.0, %v900
        %902 = vmatmul.f32.gmra.mxu0 %v839
        %v903 = vpop.f32.mrf.mxu0
        %v904 = vadd.f32 0.0, %v903
        %905 = vmatmul.f32.gmra.mxu0 %v842
        %v906 = vpop.f32.mrf.mxu0
        %v907 = vadd.f32 0.0, %v906
        %908 = vmatmul.f32.gmra.mxu0 %v845
        %v909 = vpop.f32.mrf.mxu0
        %v910 = vadd.f32 0.0, %v909
        %911 = vmatmul.f32.gmra.mxu0 %v848
        %v912 = vpop.f32.mrf.mxu0
        %v913 = vadd.f32 0.0, %v912
        %914 = vdwg.mxu0
        %931 = vrot.lane.b32.xlu0 %v868, 8
        %v932 = vpop.permute.xlu0 %931
        %933 = vrot.lane.b32.xlu0 %v871, 8
        %v934 = vpop.permute.xlu0 %933
        %935 = vrot.lane.b32.xlu0 %v874, 8
        %v936 = vpop.permute.xlu0 %935
        %937 = vrot.lane.b32.xlu0 %v877, 8
        %v938 = vpop.permute.xlu0 %937
        %939 = vrot.lane.b32.xlu0 %v880, 8
        %v940 = vpop.permute.xlu0 %939
        %941 = vrot.lane.b32.xlu0 %v883, 8
        %v942 = vpop.permute.xlu0 %941
        %943 = vrot.lane.b32.xlu0 %v886, 8
        %v944 = vpop.permute.xlu0 %943
        %945 = vrot.lane.b32.xlu0 %v889, 8
        %v946 = vpop.permute.xlu0 %945
        %947 = vrot.lane.b32.xlu0 %v892, 8
        %v948 = vpop.permute.xlu0 %947
        %949 = vrot.lane.b32.xlu0 %v895, 8
        %v950 = vpop.permute.xlu0 %949
        %951 = vrot.lane.b32.xlu0 %v898, 8
        %v952 = vpop.permute.xlu0 %951
        %953 = vrot.lane.b32.xlu0 %v901, 8
        %v954 = vpop.permute.xlu0 %953
        %955 = vrot.lane.b32.xlu0 %v904, 8
        %v956 = vpop.permute.xlu0 %955
        %957 = vrot.lane.b32.xlu0 %v907, 8
        %v958 = vpop.permute.xlu0 %957
        %959 = vrot.lane.b32.xlu0 %v910, 8
        %v960 = vpop.permute.xlu0 %959
        %961 = vrot.lane.b32.xlu0 %v913, 8
        %v962 = vpop.permute.xlu0 %961
        %vm979 = vcmask 64512
        %v980 = vsel %vm979, %v585, %v932
        %v981 = vsel %vm979, %v588, %v934
        %v982 = vsel %vm979, %v591, %v936
        %v983 = vsel %vm979, %v594, %v938
        %v984 = vsel %vm979, %v597, %v940
        %v985 = vsel %vm979, %v600, %v942
        %v986 = vsel %vm979, %v603, %v944
        %v987 = vsel %vm979, %v606, %v946
        %v988 = vsel %vm979, %v609, %v948
        %v989 = vsel %vm979, %v612, %v950
        %v990 = vsel %vm979, %v615, %v952
        %v991 = vsel %vm979, %v618, %v954
        %v992 = vsel %vm979, %v621, %v956
        %v993 = vsel %vm979, %v624, %v958
        %v994 = vsel %vm979, %v627, %v960
        %v995 = vsel %vm979, %v630, %v962
        %v996 = vsel %vm283, %v980, 0.0
        %v997 = vsel %vm283, %v981, 0.0
        %v998 = vsel %vm283, %v982, 0.0
        %v999 = vsel %vm283, %v983, 0.0
        %v1000 = vsel %vm283, %v984, 0.0
        %v1001 = vsel %vm283, %v985, 0.0
        %v1002 = vsel %vm283, %v986, 0.0
        %v1003 = vsel %vm283, %v987, 0.0
        %v1004 = vsel %vm283, %v988, 0.0
        %v1005 = vsel %vm283, %v989, 0.0
        %v1006 = vsel %vm283, %v990, 0.0
        %v1007 = vsel %vm283, %v991, 0.0
        %v1008 = vsel %vm283, %v992, 0.0
        %v1009 = vsel %vm283, %v993, 0.0
        %v1010 = vsel %vm283, %v994, 0.0
        %v1011 = vsel %vm283, %v995, 0.0
        %v1012 = vld [vmem:[%s236] sm:$0xff]
        %v1013 = vld [vmem:[%s236 + $0x8] sm:$0xff]
        %v1014 = vld [vmem:[%s236 + $0x10] sm:$0xff]
        %v1015 = vld [vmem:[%s236 + $0x18] sm:$0xff]
        %v1016 = vld [vmem:[%s236 + $0x20] sm:$0xff]
        %v1017 = vld [vmem:[%s236 + $0x28] sm:$0xff]
        %v1018 = vld [vmem:[%s236 + $0x30] sm:$0xff]
        %v1019 = vld [vmem:[%s236 + $0x38] sm:$0xff]
        %v1020 = vld [vmem:[%s236 + $0x40] sm:$0xff]
        %v1021 = vld [vmem:[%s236 + $0x48] sm:$0xff]
        %v1022 = vld [vmem:[%s236 + $0x50] sm:$0xff]
        %v1023 = vld [vmem:[%s236 + $0x58] sm:$0xff]
        %v1024 = vld [vmem:[%s236 + $0x60] sm:$0xff]
        %v1025 = vld [vmem:[%s236 + $0x68] sm:$0xff]
        %v1026 = vld [vmem:[%s236 + $0x70] sm:$0xff]
        %v1027 = vld [vmem:[%s236 + $0x78] sm:$0xff]
        %v1028 = vadd.f32 %v1012, %v996
        %v1029 = vadd.f32 %v1013, %v997
        %v1030 = vadd.f32 %v1014, %v998
        %v1031 = vadd.f32 %v1015, %v999
        %v1032 = vadd.f32 %v1016, %v1000
        %v1033 = vadd.f32 %v1017, %v1001
        %v1034 = vadd.f32 %v1018, %v1002
        %v1035 = vadd.f32 %v1019, %v1003
        %v1036 = vadd.f32 %v1020, %v1004
        %v1037 = vadd.f32 %v1021, %v1005
        %v1038 = vadd.f32 %v1022, %v1006
        %v1039 = vadd.f32 %v1023, %v1007
        %v1040 = vadd.f32 %v1024, %v1008
        %v1041 = vadd.f32 %v1025, %v1009
        %v1042 = vadd.f32 %v1026, %v1010
        %v1043 = vadd.f32 %v1027, %v1011
        %1044 = vst [vmem:[%s236] sm:$0xff] %v1028
        %1045 = vst [vmem:[%s236 + $0x8] sm:$0xff] %v1029
        %1046 = vst [vmem:[%s236 + $0x10] sm:$0xff] %v1030
        %1047 = vst [vmem:[%s236 + $0x18] sm:$0xff] %v1031
        %1048 = vst [vmem:[%s236 + $0x20] sm:$0xff] %v1032
        %1049 = vst [vmem:[%s236 + $0x28] sm:$0xff] %v1033
        %1050 = vst [vmem:[%s236 + $0x30] sm:$0xff] %v1034
        %1051 = vst [vmem:[%s236 + $0x38] sm:$0xff] %v1035
        %1052 = vst [vmem:[%s236 + $0x40] sm:$0xff] %v1036
        %1053 = vst [vmem:[%s236 + $0x48] sm:$0xff] %v1037
        %1054 = vst [vmem:[%s236 + $0x50] sm:$0xff] %v1038
        %1055 = vst [vmem:[%s236 + $0x58] sm:$0xff] %v1039
        %1056 = vst [vmem:[%s236 + $0x60] sm:$0xff] %v1040
        %1057 = vst [vmem:[%s236 + $0x68] sm:$0xff] %v1041
        %1058 = vst [vmem:[%s236 + $0x70] sm:$0xff] %v1042
        %1059 = vst [vmem:[%s236 + $0x78] sm:$0xff] %v1043
        %s1060 = sand.u32 %s140, 1
        %s1061 = scalar_lea.sflag [#allocation3], %s1060
        %s1062 = sand.u32 %s140, 1
        %s1063 = smul.addr %s1062, 128
        %s1064 = scalar_lea.vmem [#allocation2], %s1063
        // Predicated region
        $region41: #{tpu_custom_call.1} parent=35 // pred_check
          %p1065 = pneg %p150
        $region42: #{tpu_custom_call.1} parent=35 // pred_check_branch
          %1067 = sbr.rel (%p1065) target = $region44
        $region43: #{tpu_custom_call.1} parent=35 // pred_region
          %1069 = vsyncadd %s1061, 0
          %s1070 = smul.addr %s22, 16
          %s1071 = smul.addr %s1070, 8
          %s1072 = scalar_lea.hbm %s4, %s1071
          %s1073 = sshll.u32 %s1064, 4
          %s1074 = int_to_ptr.vmem [resolvable:$true] %s1073
          %s1075 = sshll.u32 %s1072, 4
          %s1076 = int_to_ptr.hbm [resolvable:$true] %s1075
          %1081 = dma.vmem_to_hbm [thread:$0]  %s1074, 2048, %s1076, %s1061, 128, 128, 8
        $region44: #{tpu_custom_call.1} parent=35 // pred_fallthru
          _
      $region36: #{tpu_custom_call.1} parent=5 // pred_fallthru
        _
      %p1082 = scmp.le.s32.totalorder 2, %s13
      // Predicated region
      $region45: #{tpu_custom_call.1} parent=5 // pred_check
        %p1083 = pneg %p1082
      $region46: #{tpu_custom_call.1} parent=5 // pred_check_branch
        %1085 = sbr.rel (%p1083) target = $region48
      $region47: #{tpu_custom_call.1} parent=5 // pred_region
        %s1086 = ssub.s32 %s13, 2
        // Predicated region
        $region49: #{tpu_custom_call.1} parent=47 // pred_check
          %p1087 = pneg %p156
        $region50: #{tpu_custom_call.1} parent=47 // pred_check_branch
          %1089 = sbr.rel (%p1087) target = $region52
        $region51: #{tpu_custom_call.1} parent=47 // pred_region
          %s1090 = sand.u32 %s141, 1
          %s1091 = scalar_lea.sflag [#allocation3], %s1090
          %s1092 = sand.u32 %s141, 1
          %s1093 = smul.addr %s1092, 128
          %s1094 = scalar_lea.vmem [#allocation2], %s1093
          %1096 = dma.done %s1091, 2048
        $region52: #{tpu_custom_call.1} parent=47 // pred_fallthru
          _
      $region48: #{tpu_custom_call.1} parent=5 // pred_fallthru
        _
    $region6: #{tpu_custom_call.1} parent=1 // loop_footer
      %s17 = sadd.s32 1, %s13
    $region7: #{tpu_custom_call.1} parent=1 // loop_footer_branch
      %12 = sbr.rel target = $region3
    $region8: #{tpu_custom_call.1} parent=1 // loop_exit
      _
    %1097 = vsyncpa [#allocation3], 1
    %s1098 = scalar_lea.sflag [#allocation3], 1
    %1099 = vsyncpa %s1098, 1

</llo_original>
